<compile_context>
chip_gen: v5e
topology: v5e:2x2
jax: 0.10.0
libtpu: 0.0.40
codegen_flags: <defaults>
</compile_context>

<pallas_src>
import functools
import math

import jax
import jax.numpy as jnp
from jax import lax
from jax.experimental import pallas as pl
from jax.experimental.pallas import tpu as pltpu


def _attention_head_kernel(x_ref, wqkv_ref, bqkv_ref, o_ref, *, d_k, scale):
    Bt, T, C = x_ref.shape
    x = x_ref[...]                                   # (Bt, T, C), native dtype
    in_dtype = x.dtype

    # --- fused QKV projection: one MXU matmul, batch folded into M ---------
    w = wqkv_ref[...]                                # (C, 3*d_k), native dtype
    b = bqkv_ref[...].astype(jnp.float32)            # (1, 3*d_k)
    qkv = jnp.dot(x.reshape(Bt * T, C), w,
                  preferred_element_type=jnp.float32) + b        # (Bt*T, 3*d_k) f32
    qkv = qkv.reshape(Bt, T, 3 * d_k)

    # Fold the 1/sqrt(d_k) scale into q (T*d_k muls, not T*T).
    q = (qkv[..., 0 * d_k:1 * d_k] * scale).astype(in_dtype)      # (Bt, T, d_k)
    k = qkv[..., 1 * d_k:2 * d_k].astype(in_dtype)                # (Bt, T, d_k)
    v = qkv[..., 2 * d_k:3 * d_k].astype(in_dtype)                # (Bt, T, d_k)

    # --- scores: contract last dims directly (no k transpose) --------------
    scores = jnp.einsum("bqd,bkd->bqk", q, k,
                        preferred_element_type=jnp.float32)       # (Bt, T, T)

    # Causal mask with a finite sentinel (no -inf -> NaN hazard).
    row = lax.broadcasted_iota(jnp.int32, (Bt, T, T), 1)
    col = lax.broadcasted_iota(jnp.int32, (Bt, T, T), 2)
    neg_big = jnp.float32(jnp.finfo(jnp.float32).min)
    scores = jnp.where(col <= row, scores, neg_big)

    # --- numerically stable softmax in f32 ---------------------------------
    m = jnp.max(scores, axis=-1, keepdims=True)
    p = jnp.exp(scores - m)
    denom = jnp.sum(p, axis=-1, keepdims=True)
    sm = p * pl.reciprocal(denom, approx=True)

    # --- attention output: batched sm @ v -----------------------------------
    att = jnp.einsum("bqk,bkd->bqd", sm.astype(v.dtype), v,
                     preferred_element_type=jnp.float32)          # (Bt, T, d_k)

    o_ref[...] = att.astype(o_ref.dtype)


def _choose_block_b(B, T):
    """How many batch elements per grid step.

    Aim for ~256 M-rows per projection matmul (feeds the 256-wide MXU on
    v6e/v7x), while keeping >= 2 grid steps when possible so v7x's second
    TensorCore gets work on the "parallel" batch axis.
    """
    target = max(1, 256 // max(T, 1))
    candidates = [d for d in range(1, B + 1) if B % d == 0 and d <= target]
    if not candidates:
        return 1
    multi = [d for d in candidates if B // d >= 2]
    return max(multi) if multi else max(candidates)


def attention_head(x, wq, bq, wk, bk, wv, bv, *, block_b=None):
    """x: (B, T, d_model); wq/wk/wv: (d_model, d_k); bq/bk/bv: (d_k,)."""
    B, T, C = x.shape
    d_k = wq.shape[1]

    if block_b is None:
        block_b = _choose_block_b(B, T)
    assert B % block_b == 0, (B, block_b)

    # Fuse the three projections into a single weight / bias.
    wqkv = jnp.concatenate([wq, wk, wv], axis=1)                  # (C, 3*d_k)
    bqkv = jnp.concatenate([bq, bk, bv], axis=0).reshape(1, 3 * d_k)

    kernel = functools.partial(_attention_head_kernel,
                               d_k=d_k, scale=1.0 / math.sqrt(d_k))

    grid = (B // block_b,)
    return pl.pallas_call(
        kernel,
        out_shape=jax.ShapeDtypeStruct((B, T, d_k), x.dtype),
        grid_spec=pltpu.PrefetchScalarGridSpec(
            num_scalar_prefetch=0,
            grid=grid,
            in_specs=[
                pl.BlockSpec((block_b, T, C), lambda b: (b, 0, 0)),   # x
                pl.BlockSpec((C, 3 * d_k), lambda b: (0, 0)),         # wqkv
                pl.BlockSpec((1, 3 * d_k), lambda b: (0, 0)),         # bqkv
            ],
            out_specs=pl.BlockSpec((block_b, T, d_k), lambda b: (b, 0, 0)),
        ),
        compiler_params=pltpu.CompilerParams(
            dimension_semantics=("parallel",)),
    )(x, wqkv, bqkv)


def _reference(x, wq, bq, wk, bk, wv, bv, d_k):
    # Pure-JAX reference matching the PyTorch forward.
    q = x @ wq + bq
    k = x @ wk + bk
    v = x @ wv + bv
    qkt = q @ jnp.swapaxes(k, -2, -1) / math.sqrt(d_k)
    T = x.shape[1]
    mask = jnp.tril(jnp.ones((T, T), dtype=bool))
    qkt = jnp.where(mask, qkt, -jnp.inf)
    sm = jax.nn.softmax(qkt, axis=-1)
    return sm @ v


if __name__ == "__main__":
    # Small shapes consistent with the module (seq_length == T).
    B, T, d_model, d_k = 2, 8, 32, 16

    key = jax.random.PRNGKey(0)
    kx, k1, k2, k3, k4, k5, k6 = jax.random.split(key, 7)

    x = jax.random.normal(kx, (B, T, d_model), dtype=jnp.float32)

    # Deterministic parameter init (PyTorch nn.Linear-style uniform bound),
    # stored already transposed to (d_model, d_k).
    bound = 1.0 / math.sqrt(d_model)
    wq = jax.random.uniform(k1, (d_model, d_k), jnp.float32, -bound, bound)
    wk = jax.random.uniform(k2, (d_model, d_k), jnp.float32, -bound, bound)
    wv = jax.random.uniform(k3, (d_model, d_k), jnp.float32, -bound, bound)
    bq = jax.random.uniform(k4, (d_k,), jnp.float32, -bound, bound)
    bk = jax.random.uniform(k5, (d_k,), jnp.float32, -bound, bound)
    bv = jax.random.uniform(k6, (d_k,), jnp.float32, -bound, bound)

    out = attention_head(x, wq, bq, wk, bk, wv, bv)
    out = jax.block_until_ready(out)

    ref = _reference(x, wq, bq, wk, bk, wv, bv, d_k)
    assert out.shape == (B, T, d_k)
    # Tolerance accounts for the EUP approximate reciprocal in the softmax.
    assert jnp.allclose(out, ref, atol=1e-2, rtol=1e-2), \
        f"max abs err = {jnp.max(jnp.abs(out - ref))}"

    print("KERNEL_OK")
</pallas_src>

<mosaic_0001>
module attributes {stable_mosaic.version = 11 : i64} {
  func.func @_attention_head_kernel(%arg0: i32, %arg1: memref<1x8x32xf32, #tpu.memory_space<vmem>>, %arg2: memref<32x48xf32, #tpu.memory_space<vmem>>, %arg3: memref<1x48xf32, #tpu.memory_space<vmem>>, %arg4: memref<1x8x16xf32, #tpu.memory_space<vmem>>) attributes {dimension_semantics = [#tpu.dimension_semantics<parallel>], iteration_bounds = array<i64: 2>, scalar_prefetch = 0 : i64, scratch_operands = 0 : i64, tpu.core_type = #tpu.core_type<tc>, window_params = [{transform_indices = @transform_0, window_bounds = array<i64: 1, 8, 32>}, {pipeline_mode = #tpu.pipeline_mode<synchronous>, transform_indices = @transform_1, window_bounds = array<i64: 32, 48>}, {pipeline_mode = #tpu.pipeline_mode<synchronous>, transform_indices = @transform_2, window_bounds = array<i64: 1, 48>}, {transform_indices = @transform_3, window_bounds = array<i64: 1, 8, 16>}]} {
    %c0 = arith.constant 0 : index
    %c0_0 = arith.constant 0 : index
    %c0_1 = arith.constant 0 : index
    %0 = vector.load %arg1[%c0, %c0_0, %c0_1] : memref<1x8x32xf32, #tpu.memory_space<vmem>>, vector<1x8x32xf32>
    %c0_2 = arith.constant 0 : index
    %c0_3 = arith.constant 0 : index
    %1 = vector.load %arg2[%c0_2, %c0_3] : memref<32x48xf32, #tpu.memory_space<vmem>>, vector<32x48xf32>
    %c0_4 = arith.constant 0 : index
    %c0_5 = arith.constant 0 : index
    %2 = vector.load %arg3[%c0_4, %c0_5] : memref<1x48xf32, #tpu.memory_space<vmem>>, vector<1x48xf32>
    %3 = vector.shape_cast %0 : vector<1x8x32xf32> to vector<8x32xf32>
    %cst = arith.constant dense<0.000000e+00> : vector<8x48xf32>
    %4 = tpu.matmul %3, %1, %cst {dimension_numbers = #tpu.dot_dimension_numbers<[1], [0], [0], [1], [0, 0, 1, 1], [], []>} : vector<8x32xf32>, vector<32x48xf32>, vector<8x48xf32> -> vector<8x48xf32>
    %5 = vector.broadcast %2 : vector<1x48xf32> to vector<8x48xf32>
    %6 = arith.addf %4, %5 : vector<8x48xf32>
    %7 = vector.shape_cast %6 : vector<8x48xf32> to vector<1x8x48xf32>
    %8 = vector.extract_strided_slice %7 {offsets = [0, 0, 0], sizes = [1, 8, 16], strides = [1, 1, 1]} : vector<1x8x48xf32> to vector<1x8x16xf32>
    %cst_6 = arith.constant 2.500000e-01 : f32
    %9 = vector.broadcast %cst_6 : f32 to vector<1x8x16xf32>
    %10 = arith.mulf %8, %9 : vector<1x8x16xf32>
    %11 = vector.extract_strided_slice %7 {offsets = [0, 0, 16], sizes = [1, 8, 16], strides = [1, 1, 1]} : vector<1x8x48xf32> to vector<1x8x16xf32>
    %12 = vector.extract_strided_slice %7 {offsets = [0, 0, 32], sizes = [1, 8, 16], strides = [1, 1, 1]} : vector<1x8x48xf32> to vector<1x8x16xf32>
    "tpu.trace_start"() <{level = 10 : i32, message = "bqd,bkd->bqk"}> : () -> ()
    %cst_7 = arith.constant dense<0.000000e+00> : vector<1x8x8xf32>
    %13 = tpu.matmul %10, %11, %cst_7 {dimension_numbers = #tpu.dot_dimension_numbers<[2], [2], [1], [1], [0, 0, 0, 1, 1, 1], [0], [0]>} : vector<1x8x16xf32>, vector<1x8x16xf32>, vector<1x8x8xf32> -> vector<1x8x8xf32>
    "tpu.trace_stop"() : () -> ()
    %14 = tpu.iota {dimensions = array<i32: 1>} : vector<1x8x8xi32>
    %15 = tpu.iota {dimensions = array<i32: 2>} : vector<1x8x8xi32>
    %16 = arith.cmpi sle, %15, %14 : vector<1x8x8xi32>
    %cst_8 = arith.constant -3.40282347E+38 : f32
    %17 = vector.broadcast %cst_8 : f32 to vector<1x8x8xf32>
    %18 = arith.select %16, %13, %17 : vector<1x8x8xi1>, vector<1x8x8xf32>
    %cst_9 = arith.constant dense<0xFF800000> : vector<1x8xf32>
    %19 = vector.multi_reduction <maximumf>, %18, %cst_9 [2] : vector<1x8x8xf32> to vector<1x8xf32>
    %20 = vector.shape_cast %19 : vector<1x8xf32> to vector<1x8x1xf32>
    %21 = vector.broadcast %20 : vector<1x8x1xf32> to vector<1x8x8xf32>
    %22 = arith.subf %18, %21 : vector<1x8x8xf32>
    %23 = math.exp %22 : vector<1x8x8xf32>
    %cst_10 = arith.constant dense<0.000000e+00> : vector<1x8xf32>
    %24 = vector.multi_reduction <add>, %23, %cst_10 [2] : vector<1x8x8xf32> to vector<1x8xf32>
    %25 = vector.shape_cast %24 : vector<1x8xf32> to vector<1x8x1xf32>
    %26 = tpu.reciprocal %25 {approx = true} : vector<1x8x1xf32> -> vector<1x8x1xf32>
    %27 = vector.broadcast %26 : vector<1x8x1xf32> to vector<1x8x8xf32>
    %28 = arith.mulf %23, %27 : vector<1x8x8xf32>
    "tpu.trace_start"() <{level = 10 : i32, message = "bqk,bkd->bqd"}> : () -> ()
    %cst_11 = arith.constant dense<0.000000e+00> : vector<1x8x16xf32>
    %29 = tpu.matmul %28, %12, %cst_11 {dimension_numbers = #tpu.dot_dimension_numbers<[2], [1], [1], [2], [0, 0, 0, 1, 1, 2], [0], [0]>} : vector<1x8x8xf32>, vector<1x8x16xf32>, vector<1x8x16xf32> -> vector<1x8x16xf32>
    "tpu.trace_stop"() : () -> ()
    %c0_12 = arith.constant 0 : index
    %c0_13 = arith.constant 0 : index
    %c0_14 = arith.constant 0 : index
    %30 = vector.load %arg4[%c0_12, %c0_13, %c0_14] : memref<1x8x16xf32, #tpu.memory_space<vmem>>, vector<1x8x16xf32>
    tpu.vector_store %arg4[%c0_12, %c0_13, %c0_14], %29 {strides = array<i32>} : memref<1x8x16xf32, #tpu.memory_space<vmem>>, vector<1x8x16xf32>,
    return
  }
  func.func @transform_0(%arg0: i32) -> (i32, i32, i32) {
    %c0_i32 = arith.constant 0 : i32
    %c0_i32_0 = arith.constant 0 : i32
    %c0_i32_1 = arith.constant 0 : i32
    return %arg0, %c0_i32, %c0_i32_0 : i32, i32, i32
  }
  func.func @transform_1(%arg0: i32) -> (i32, i32) {
    %c0_i32 = arith.constant 0 : i32
    %c0_i32_0 = arith.constant 0 : i32
    %c0_i32_1 = arith.constant 0 : i32
    return %c0_i32, %c0_i32_0 : i32, i32
  }
  func.func @transform_2(%arg0: i32) -> (i32, i32) {
    %c0_i32 = arith.constant 0 : i32
    %c0_i32_0 = arith.constant 0 : i32
    %c0_i32_1 = arith.constant 0 : i32
    return %c0_i32, %c0_i32_0 : i32, i32
  }
  func.func @transform_3(%arg0: i32) -> (i32, i32, i32) {
    %c0_i32 = arith.constant 0 : i32
    %c0_i32_0 = arith.constant 0 : i32
    %c0_i32_1 = arith.constant 0 : i32
    return %arg0, %c0_i32, %c0_i32_0 : i32, i32, i32
  }
}

</mosaic_0001>

<llo_original>
// kernel: tpu_custom_call.1
$region0: #{tpu_custom_call.1}
  #allocation0 [shape = 'u32[]', space=smem, size = 0x4, offset = 0x4, fixed_abs, tag = 'smem constant byte address 0x4 - core index']
  #allocation1 [shape = 'u32[72,128]{1,0:T(1,128)}', space=vmem, size = 0x9000, scoped, tag = 'internal scratch']
  %s0 = inlined_call_operand.hbm [shape: f32[2,8,32], index: 0, kind: input, shape index: {}]
  %s1 = inlined_call_operand.hbm [shape: f32[32,48], index: 1, kind: input, shape index: {}]
  %s2 = inlined_call_operand.vmem [shape: f32[1,48], index: 2, kind: input, shape index: {}]
  %s3 = inlined_call_operand.hbm [shape: f32[2,8,16], index: 3, kind: output, shape index: {}]
  %s4 = sld [smem:[#allocation0]]
  $region53: #{tpu_custom_call.1} parent=0
    _
  %s6 = ssub.s32 1, %s4
  %s7 = scalar_select 0, %s6, %s4
  $region1: #{tpu_custom_call.1} parent=0
    #allocation2 [shape = 'u8[8192]{0}', space=vmem, size = 0x2000, scoped, tag = 'input window, operand 0']
    #allocation3 [shape = 's32[2]{0}', space=sflag, size = 0x8, scoped, tag = 'scoped memory for tpu_custom_call.1']
    #allocation4 [shape = 's32[2]{0}', space=sflag, size = 0x8, scoped, tag = 'scoped memory for tpu_custom_call.1']
    #allocation5 [shape = 'u8[16384]{0}', space=vmem, size = 0x4000, scoped, tag = 'input window, operand 1, single buffered']
    #allocation6 [shape = 's32[1]{0}', space=sflag, size = 0x4, scoped, tag = 'scoped memory for tpu_custom_call.1']
    #allocation7 [shape = 'u8[8192]{0}', space=vmem, size = 0x2000, scoped, tag = 'output window, operand 0']
    %8 = vsyncpa [#allocation3], 0
    %s9 = scalar_lea.sflag [#allocation3], 1
    %10 = vsyncpa %s9, 0
    %11 = vsyncpa [#allocation6], 0
    %12 = vsyncpa [#allocation4], 0
    %s13 = scalar_lea.sflag [#allocation4], 1
    %14 = vsyncpa %s13, 0
    loop: start=0, step=1, limit=4
    $region2: #{tpu_custom_call.1} parent=1 // loop_pre_header
      _
    $region3: #{tpu_custom_call.1} parent=1 // loop_header
      %s16 = sphi 0, %s20
      %p17 = scmp.ge.s32.totalorder %s16, 4
      %s26 = sphi 0, %s28
      %s29 = sphi 0, %s26
      %s30 = sphi 0, %s29
      %s46 = sphi 0, %s30
      %s50 = sphi 0, %s50
      %s52 = sphi 0, %s50
      %s53 = sphi 0, %s52
      %s67 = sphi 0, %s53
      %s71 = sphi 0, %s71
      %s73 = sphi 0, %s71
      %s74 = sphi 0, %s73
      %s88 = sphi 0, %s74
      %s94 = sphi 0, %s96
      %s97 = sphi 0, %s94
      %s98 = sphi 0, %s97
      %s114 = sphi 0, %s98
    $region4: #{tpu_custom_call.1} parent=1 // loop_header_branch
      %19 = sbr.rel (%p17) target = $region8
    $region5: #{tpu_custom_call.1} parent=1 // loop_body
      %s21 = ssub.s32 %s16, 1
      %s22 = ssub.s32 %s16, 2
      %s23 = sadd.s32 %s16, 1
      %s24 = ssub.s32 %s16, %s23
      %p25 = scmp.eq.s32.totalorder %s24, 0
      %s27 = sadd.s32 %s26, 1
      %s28 = scalar_select %p25, %s26, %s27
      %p31 = pneg %p25
      %p32 = scmp.eq.s32.totalorder %s16, 1
      %p33 = por %p31, %p32
      %p34 = scmp.ne.s32.totalorder %s26, %s29
      %p35 = scmp.eq.s32.totalorder %s16, 0
      %p36 = por %p34, %p35
      %p37 = scmp.ne.s32.totalorder %s26, %s29
      %p38 = scmp.eq.s32.totalorder %s21, 1
      %p39 = por %p37, %p38
      %p40 = scmp.ne.s32.totalorder %s29, %s30
      %p41 = scmp.eq.s32.totalorder %s21, 0
      %p42 = por %p40, %p41
      %p43 = scmp.ne.s32.totalorder %s29, %s30
      %p44 = scmp.eq.s32.totalorder %s22, 1
      %p45 = por %p43, %p44
      %p47 = scmp.ne.s32.totalorder %s30, %s46
      %p48 = scmp.eq.s32.totalorder %s22, 0
      %p49 = por %p47, %p48
      %s51 = sadd.s32 %s50, 1
      %p54 = scmp.eq.s32.totalorder %s16, 1
      %p55 = scmp.ne.s32.totalorder %s50, %s52
      %p56 = scmp.eq.s32.totalorder %s16, 0
      %p57 = por %p55, %p56
      %p58 = scmp.ne.s32.totalorder %s50, %s52
      %p59 = scmp.eq.s32.totalorder %s21, 1
      %p60 = por %p58, %p59
      %p61 = scmp.ne.s32.totalorder %s52, %s53
      %p62 = scmp.eq.s32.totalorder %s21, 0
      %p63 = por %p61, %p62
      %p64 = scmp.ne.s32.totalorder %s52, %s53
      %p65 = scmp.eq.s32.totalorder %s22, 1
      %p66 = por %p64, %p65
      %p68 = scmp.ne.s32.totalorder %s53, %s67
      %p69 = scmp.eq.s32.totalorder %s22, 0
      %p70 = por %p68, %p69
      %s72 = sadd.s32 %s71, 1
      %p75 = scmp.eq.s32.totalorder %s16, 1
      %p76 = scmp.ne.s32.totalorder %s71, %s73
      %p77 = scmp.eq.s32.totalorder %s16, 0
      %p78 = por %p76, %p77
      %p79 = scmp.ne.s32.totalorder %s71, %s73
      %p80 = scmp.eq.s32.totalorder %s21, 1
      %p81 = por %p79, %p80
      %p82 = scmp.ne.s32.totalorder %s73, %s74
      %p83 = scmp.eq.s32.totalorder %s21, 0
      %p84 = por %p82, %p83
      %p85 = scmp.ne.s32.totalorder %s73, %s74
      %p86 = scmp.eq.s32.totalorder %s22, 1
      %p87 = por %p85, %p86
      %p89 = scmp.ne.s32.totalorder %s74, %s88
      %p90 = scmp.eq.s32.totalorder %s22, 0
      %p91 = por %p89, %p90
      %s92 = ssub.s32 %s16, %s23
      %p93 = scmp.eq.s32.totalorder %s92, 0
      %s95 = sadd.s32 %s94, 1
      %s96 = scalar_select %p93, %s94, %s95
      %p99 = pneg %p93
      %p100 = scmp.eq.s32.totalorder %s16, 1
      %p101 = por %p99, %p100
      %p102 = scmp.ne.s32.totalorder %s94, %s97
      %p103 = scmp.eq.s32.totalorder %s16, 0
      %p104 = por %p102, %p103
      %p105 = scmp.ne.s32.totalorder %s94, %s97
      %p106 = scmp.eq.s32.totalorder %s21, 1
      %p107 = por %p105, %p106
      %p108 = scmp.ne.s32.totalorder %s97, %s98
      %p109 = scmp.eq.s32.totalorder %s21, 0
      %p110 = por %p108, %p109
      %p111 = scmp.ne.s32.totalorder %s97, %s98
      %p112 = scmp.eq.s32.totalorder %s22, 1
      %p113 = por %p111, %p112
      %p115 = scmp.ne.s32.totalorder %s98, %s114
      %p116 = scmp.eq.s32.totalorder %s22, 0
      %p117 = por %p115, %p116
      %p118 = scmp.le.s32.totalorder 1, %s16
      %p119 = scmp.lt.s32.totalorder %s16, 3
      %p120 = pnand %p118, %p119
      %p121 = pneg %p120
      // Predicated region
      $region9: #{tpu_custom_call.1} parent=5 // pred_check
        _
      $region10: #{tpu_custom_call.1} parent=5 // pred_check_branch
        %123 = sbr.rel (%p120) target = $region12
      $region11: #{tpu_custom_call.1} parent=5 // pred_region
        %s124 = ssub.s32 %s16, 1
        // Predicated region
        $region13: #{tpu_custom_call.1} parent=11 // pred_check
          %p125 = pneg %p63
        $region14: #{tpu_custom_call.1} parent=11 // pred_check_branch
          %127 = sbr.rel (%p125) target = $region16
        $region15: #{tpu_custom_call.1} parent=11 // pred_region
          %129 = vsyncadd [#allocation6], 0
          %s130 = sshll.u32 %s1, 4
          %s131 = int_to_ptr.hbm [resolvable:$true] %s130
          %s132 = sshll.u32 [#allocation5], 4
          %s133 = int_to_ptr.vmem [resolvable:$true] %s132
          %138 = dma.hbm_to_vmem [thread:$0]  %s131, 512, %s133, [#allocation6], 128, 128, 8
        $region16: #{tpu_custom_call.1} parent=11 // pred_fallthru
          _
        // Predicated region
        $region17: #{tpu_custom_call.1} parent=11 // pred_check
          %p139 = pneg %p84
        $region18: #{tpu_custom_call.1} parent=11 // pred_check_branch
          %141 = sbr.rel (%p139) target = $region20
        $region19: #{tpu_custom_call.1} parent=11 // pred_region
          _
        $region20: #{tpu_custom_call.1} parent=11 // pred_fallthru
          _
      $region12: #{tpu_custom_call.1} parent=5 // pred_fallthru
        _
      %p142 = scmp.lt.s32.totalorder %s16, 2
      // Predicated region
      $region21: #{tpu_custom_call.1} parent=5 // pred_check
        %p143 = pneg %p142
      $region22: #{tpu_custom_call.1} parent=5 // pred_check_branch
        %145 = sbr.rel (%p143) target = $region24
      $region23: #{tpu_custom_call.1} parent=5 // pred_region
        // Predicated region
        $region25: #{tpu_custom_call.1} parent=23 // pred_check
          %p146 = pneg %p36
        $region26: #{tpu_custom_call.1} parent=23 // pred_check_branch
          %148 = sbr.rel (%p146) target = $region28
        $region27: #{tpu_custom_call.1} parent=23 // pred_region
          %s149 = sand.u32 %s26, 1
          %s150 = scalar_lea.sflag [#allocation3], %s149
          %s151 = sand.u32 %s26, 1
          %s152 = smul.addr %s151, 8
          %s153 = scalar_lea.vmem [#allocation2], %s152
          %155 = vsyncadd %s150, 0
          %s156 = smul.addr %s16, 8
          %s157 = scalar_lea.hbm %s0, %s156
          %s159 = sshll.u32 %s157, 4
          %s160 = int_to_ptr.hbm [resolvable:$true] %s159
          %s161 = sshll.u32 %s153, 4
          %s162 = int_to_ptr.vmem [resolvable:$true] %s161
          %164 = dma.hbm_to_vmem [thread:$0]  %s160, 128, %s162, %s150
        $region28: #{tpu_custom_call.1} parent=23 // pred_fallthru
          _
      $region24: #{tpu_custom_call.1} parent=5 // pred_fallthru
        _
      %p165 = scmp.le.s32.totalorder 1, %s16
      %p166 = scmp.lt.s32.totalorder %s16, 3
      %p167 = pnand %p165, %p166
      %p168 = pneg %p167
      // Predicated region
      $region29: #{tpu_custom_call.1} parent=5 // pred_check
        _
      $region30: #{tpu_custom_call.1} parent=5 // pred_check_branch
        %170 = sbr.rel (%p167) target = $region32
      $region31: #{tpu_custom_call.1} parent=5 // pred_region
        %s171 = ssub.s32 %s16, 1
        %s172 = sand.u32 %s29, 1
        %s173 = scalar_lea.sflag [#allocation3], %s172
        %s174 = sand.u32 %s29, 1
        %s175 = smul.addr %s174, 8
        %s176 = scalar_lea.vmem [#allocation2], %s175
        // Predicated region
        $region33: #{tpu_custom_call.1} parent=31 // pred_check
          %p177 = pneg %p42
        $region34: #{tpu_custom_call.1} parent=31 // pred_check_branch
          %179 = sbr.rel (%p177) target = $region36
        $region35: #{tpu_custom_call.1} parent=31 // pred_region
          %181 = dma.done %s173, 128
        $region36: #{tpu_custom_call.1} parent=31 // pred_fallthru
          _
        // Predicated region
        $region37: #{tpu_custom_call.1} parent=31 // pred_check
          %p182 = pneg %p63
        $region38: #{tpu_custom_call.1} parent=31 // pred_check_branch
          %184 = sbr.rel (%p182) target = $region40
        $region39: #{tpu_custom_call.1} parent=31 // pred_region
          %186 = dma.done [#allocation6], 512
        $region40: #{tpu_custom_call.1} parent=31 // pred_fallthru
          _
        %s187 = sand.u32 %s29, 1
        %s188 = scalar_lea.sflag [#allocation3], %s187
        %s189 = sand.u32 %s29, 1
        %s190 = smul.addr %s189, 8
        %s191 = scalar_lea.vmem [#allocation2], %s190
        %p192 = pneg %p42
        %p193 = pneg %p39
        %p194 = pneg %p63
        %p195 = pneg %p60
        %p196 = pneg %p84
        %p197 = pneg %p81
        %p198 = pneg %p110
        %p199 = pneg %p107
        %s200 = sand.u32 %s97, 1
        %s201 = scalar_lea.sflag [#allocation4], %s200
        %s202 = sand.u32 %s97, 1
        %s203 = smul.addr %s202, 8
        %s204 = scalar_lea.vmem [#allocation7], %s203
        %v205 = vld [vmem:[%s176] sm:$0xff]
        %v206 = vld [vmem:[#allocation5] sm:$0xff]
        %v207 = vld [vmem:[#allocation5 + $0x8] sm:$0xff]
        %v208 = vld [vmem:[#allocation5 + $0x10] sm:$0xff]
        %v209 = vld [vmem:[#allocation5 + $0x18] sm:$0xff]
        %v210 = vld [vmem:[%s2] sm:$0x1]
        %v212 = vperm.slane %v210, 0
        %vm214 = vcmask 261120
        %v216 = vsel %vm214, %v205, 0
        %218 = vmatpush.msra.mxu0 0.0
        %219 = vmatpush.msra.mxu0 0.0
        %220 = vmatpush.msra.mxu0 0.0
        %221 = vmatpush.msra.mxu0 0.0
        %222 = vmatpush.msra.mxu0 0.0
        %223 = vmatpush.msra.mxu0 0.0
        %224 = vmatpush.msra.mxu0 0.0
        %225 = vmatpush.msra.mxu0 0.0
        %226 = vmatpush.msra.mxu0 0.0
        %227 = vmatpush.msra.mxu0 0.0
        %228 = vmatpush.msra.mxu0 0.0
        %229 = vmatpush.msra.mxu0 0.0
        %230 = vmatpush.msra.mxu0 %v209
        %231 = vmatpush.msra.mxu0 %v208
        %232 = vmatpush.msra.mxu0 %v207
        %233 = vmatpush.msra.mxu0 %v206
        %234 = vmatmul.f32.gmra.mxu0 %v216
        %v235 = vpop.f32.mrf.mxu0
        %v236 = vadd.f32 %v212, %v235
        %237 = vdwg.mxu0
        %v238 = vmul.f32 %v236, 0.25
        %240 = vrot.lane.b32.xlu0 %v236, 112
        %v241 = vpop.permute.xlu0 %240
        %vm242 = vcmask 130048
        %v244 = vsel %vm242, %v238, 0
        %v246 = vsel %vm242, %v241, 0
        %248 = vmatpush.xpose.msra.mxu0 0.0
        %249 = vmatpush.xpose.msra.mxu0 0.0
        %250 = vmatpush.xpose.msra.mxu0 0.0
        %251 = vmatpush.xpose.msra.mxu0 0.0
        %252 = vmatpush.xpose.msra.mxu0 0.0
        %253 = vmatpush.xpose.msra.mxu0 0.0
        %254 = vmatpush.xpose.msra.mxu0 0.0
        %255 = vmatpush.xpose.msra.mxu0 0.0
        %256 = vmatpush.xpose.msra.mxu0 0.0
        %257 = vmatpush.xpose.msra.mxu0 0.0
        %258 = vmatpush.xpose.msra.mxu0 0.0
        %259 = vmatpush.xpose.msra.mxu0 0.0
        %260 = vmatpush.xpose.msra.mxu0 0.0
        %261 = vmatpush.xpose.msra.mxu0 0.0
        %262 = vmatpush.xpose.msra.mxu0 0.0
        %263 = vmatpush.xpose.msra.mxu0 %v246
        %264 = vmatmul.f32.gmra.mxu0 %v244
        %v265 = vpop.f32.mrf.mxu0
        %v266 = vadd.f32 0.0, %v265
        %267 = vdwg.mxu0
        %v268 = vlaneseq
        %v269 = vshrl.u32 %v268, 7
        %v270 = vlaneseq
        %v271 = vand.u32 %v270, 127
        %vm272 = vcmp.le.s32.totalorder %v271, %v269
        %v273 = vsel %vm272, %v266, -3.4028235e+38
        %vm274 = vcmask 64512
        %v275 = vsel %vm274, %v273, -inf
        %276 = vmax.xlane.f32.xlu0 %v275
        %v277 = vpop.xlane.xlu0 %276
        %v278 = vsub.f32 %v273, %v277
        %v279 = vmul.f32 %v278, 1.442695
        %v280 = vpow.pop %v279
        %v281 = vsel %vm274, %v280, 0.0
        %282 = vadd.xlane.f32.xlu0 %v281
        %v283 = vpop.xlane.xlu0 %282
        %v284 = vrcp.pop %v283
        %v285 = vmul.f32 %v280, %v284
        %286 = vrot.lane.b32.xlu0 %v236, 96
        %v287 = vpop.permute.xlu0 %286
        %v290 = vsel %vm274, %v285, 0
        %292 = vmatpush.msra.mxu0 0.0
        %293 = vmatpush.msra.mxu0 0.0
        %294 = vmatpush.msra.mxu0 0.0
        %295 = vmatpush.msra.mxu0 0.0
        %296 = vmatpush.msra.mxu0 0.0
        %297 = vmatpush.msra.mxu0 0.0
        %298 = vmatpush.msra.mxu0 0.0
        %299 = vmatpush.msra.mxu0 0.0
        %300 = vmatpush.msra.mxu0 0.0
        %301 = vmatpush.msra.mxu0 0.0
        %302 = vmatpush.msra.mxu0 0.0
        %303 = vmatpush.msra.mxu0 0.0
        %304 = vmatpush.msra.mxu0 0.0
        %305 = vmatpush.msra.mxu0 0.0
        %306 = vmatpush.msra.mxu0 0.0
        %307 = vmatpush.msra.mxu0 %v287
        %308 = vmatmul.f32.gmra.mxu0 %v290
        %v309 = vpop.f32.mrf.mxu0
        %v310 = vadd.f32 0.0, %v309
        %311 = vdwg.mxu0
        %312 = vst.msk [vmem:[%s204] sm:$0xff] %vm242, %v310
        %s313 = sand.u32 %s97, 1
        %s314 = scalar_lea.sflag [#allocation4], %s313
        %s315 = sand.u32 %s97, 1
        %s316 = smul.addr %s315, 8
        %s317 = scalar_lea.vmem [#allocation7], %s316
        // Predicated region
        $region41: #{tpu_custom_call.1} parent=31 // pred_check
          %p318 = pneg %p107
        $region42: #{tpu_custom_call.1} parent=31 // pred_check_branch
          %320 = sbr.rel (%p318) target = $region44
        $region43: #{tpu_custom_call.1} parent=31 // pred_region
          %322 = vsyncadd %s314, 0
          %s323 = smul.addr %s21, 8
          %s324 = scalar_lea.hbm %s3, %s323
          %s326 = sshll.u32 %s317, 4
          %s327 = int_to_ptr.vmem [resolvable:$true] %s326
          %s328 = sshll.u32 %s324, 4
          %s329 = int_to_ptr.hbm [resolvable:$true] %s328
          %331 = dma.vmem_to_hbm [thread:$0]  %s327, 128, %s329, %s314
        $region44: #{tpu_custom_call.1} parent=31 // pred_fallthru
          _
      $region32: #{tpu_custom_call.1} parent=5 // pred_fallthru
        _
      %p332 = scmp.le.s32.totalorder 2, %s16
      // Predicated region
      $region45: #{tpu_custom_call.1} parent=5 // pred_check
        %p333 = pneg %p332
      $region46: #{tpu_custom_call.1} parent=5 // pred_check_branch
        %335 = sbr.rel (%p333) target = $region48
      $region47: #{tpu_custom_call.1} parent=5 // pred_region
        %s336 = ssub.s32 %s16, 2
        // Predicated region
        $region49: #{tpu_custom_call.1} parent=47 // pred_check
          %p337 = pneg %p113
        $region50: #{tpu_custom_call.1} parent=47 // pred_check_branch
          %339 = sbr.rel (%p337) target = $region52
        $region51: #{tpu_custom_call.1} parent=47 // pred_region
          %s340 = sand.u32 %s98, 1
          %s341 = scalar_lea.sflag [#allocation4], %s340
          %s342 = sand.u32 %s98, 1
          %s343 = smul.addr %s342, 8
          %s344 = scalar_lea.vmem [#allocation7], %s343
          %346 = dma.done %s341, 128
        $region52: #{tpu_custom_call.1} parent=47 // pred_fallthru
          _
      $region48: #{tpu_custom_call.1} parent=5 // pred_fallthru
        _
    $region6: #{tpu_custom_call.1} parent=1 // loop_footer
      %s20 = sadd.s32 1, %s16
    $region7: #{tpu_custom_call.1} parent=1 // loop_footer_branch
      %15 = sbr.rel target = $region3
    $region8: #{tpu_custom_call.1} parent=1 // loop_exit
      _
    %347 = vsyncpa [#allocation3], 1
    %s348 = scalar_lea.sflag [#allocation3], 1
    %349 = vsyncpa %s348, 1
    %350 = vsyncpa [#allocation6], 1
    %351 = vsyncpa [#allocation4], 1
    %s352 = scalar_lea.sflag [#allocation4], 1
    %353 = vsyncpa %s352, 1

</llo_original>
